<compile_context>
chip_gen: v5e
topology: v5e:2x2
jax: 0.10.0
libtpu: 0.0.40
codegen_flags: <defaults>
</compile_context>

<pallas_src>
from functools import partial

import jax
import jax.numpy as jnp
from jax.experimental import pallas as pl
from jax.experimental.pallas import tpu as pltpu

_LANES = 128          # lane width: batch elements per row
_MAX_ROW_TILE = 2048  # 2048 x 128 x 4 B = 1 MiB per input tile


def _round_up(a, m):
    return ((a + m - 1) // m) * m


def _fitter_kernel(x_ref, w1_ref, b1_ref, w2_ref, b2_ref, o_ref, *, num_hidden):
    # x_ref : (row_tile, 128) VMEM tile, batch packed densely into (sublane, lane)
    # w1_ref, b1_ref, w2_ref : (H,) SMEM scalar arrays; b2_ref : (1,) SMEM scalar
    x = x_ref[...]                                    # (row_tile, 128) f32
    acc = jnp.zeros_like(x)
    # Statically unrolled H-loop: scalar broadcast (SMEM) * tile, tanh on EUP,
    # FMA accumulation on VPU.  H is a compile-time constant.
    for j in range(num_hidden):
        h = jnp.tanh(w1_ref[j] * x + b1_ref[j])      # VPU + EUP
        acc = acc + w2_ref[j] * h                     # VPU FMA
    o_ref[...] = (acc + b2_ref[0]).astype(o_ref.dtype)


def fitter_forward(x, w1, b1, w2, b2):
    """Fitter forward pass.

    x  : (B, 1) float32           (PyTorch layout)
    w1 : (H, 1) float32           (fc1.weight, torch layout (out=H, in=1))
    b1 : (H,)   float32           (fc1.bias)
    w2 : (1, H) float32           (fc2.weight, torch layout (out=1, in=H))
    b2 : (1,)   float32           (fc2.bias)
    returns (B, 1) float32
    """
    B = int(x.shape[0])
    H = int(w1.shape[0])

    # ---- batch packing: (B, 1) -> (Rp, 128), lane- and sublane-dense --------
    R = -(-B // _LANES)                               # rows of 128 lanes
    if R > _MAX_ROW_TILE:
        nblk = -(-R // _MAX_ROW_TILE)
    elif R >= 16:
        nblk = 2                                      # keep >=2 grid steps (v7x megacore)
    else:
        nblk = 1
    row_tile = -(-R // nblk)
    if nblk > 1:
        row_tile = _round_up(row_tile, 8)             # (8,128) block divisibility
    Rp = row_tile * nblk
    Bp = Rp * _LANES

    x_flat = x.reshape(B).astype(jnp.float32)
    if Bp != B:
        # Bounded pad: at most one row-tile grain; tiny fraction of any large B.
        x_flat = jnp.pad(x_flat, (0, Bp - B))
    x2d = x_flat.reshape(Rp, _LANES)

    # ---- weights as flat SMEM scalars ---------------------------------------
    w1_s = w1.reshape(H).astype(jnp.float32)
    b1_s = b1.reshape(H).astype(jnp.float32)
    w2_s = w2.reshape(H).astype(jnp.float32)
    b2_s = b2.reshape(1).astype(jnp.float32)

    cost = pl.CostEstimate(
        flops=4 * Bp * H + Bp,
        transcendentals=Bp * H,
        bytes_accessed=4 * (2 * Bp + 3 * H + 1),
    )

    y2d = pl.pallas_call(
        partial(_fitter_kernel, num_hidden=H),
        out_shape=jax.ShapeDtypeStruct((Rp, _LANES), jnp.float32),
        grid=(nblk,),
        in_specs=[
            pl.BlockSpec((row_tile, _LANES), lambda i: (i, 0)),    # x tile (VMEM)
            pl.BlockSpec(memory_space=pltpu.MemorySpace.SMEM),     # w1 (H,)
            pl.BlockSpec(memory_space=pltpu.MemorySpace.SMEM),     # b1 (H,)
            pl.BlockSpec(memory_space=pltpu.MemorySpace.SMEM),     # w2 (H,)
            pl.BlockSpec(memory_space=pltpu.MemorySpace.SMEM),     # b2 (1,)
        ],
        out_specs=pl.BlockSpec((row_tile, _LANES), lambda i: (i, 0)),
        compiler_params=pltpu.CompilerParams(
            dimension_semantics=("parallel",),
        ),
        cost_estimate=cost,
    )(x2d, w1_s, b1_s, w2_s, b2_s)

    return y2d.reshape(Bp)[:B].reshape(B, 1).astype(x.dtype)


def init_fitter_params(key, num_hidden_nodes):
    """Deterministic init mimicking torch.nn.Linear (uniform +/- 1/sqrt(fan_in)),
    stored in the native torch layouts."""
    k1, k2, k3, k4 = jax.random.split(key, 4)
    H = num_hidden_nodes
    bound1 = 1.0                                   # 1/sqrt(in_features=1)
    w1 = jax.random.uniform(k1, (H, 1), jnp.float32, -bound1, bound1)   # fc1.weight
    b1 = jax.random.uniform(k2, (H,), jnp.float32, -bound1, bound1)     # fc1.bias
    bound2 = 1.0 / float(H) ** 0.5                 # 1/sqrt(in_features=H)
    w2 = jax.random.uniform(k3, (1, H), jnp.float32, -bound2, bound2)   # fc2.weight
    b2 = jax.random.uniform(k4, (1,), jnp.float32, -bound2, bound2)     # fc2.bias
    return w1, b1, w2, b2


def _reference(x, w1, b1, w2, b2):
    # Pure-JAX reference of the torch forward: fc2(tanh(fc1(x)))
    h = jnp.tanh(x @ w1.T + b1)
    return h @ w2.T + b2


if __name__ == "__main__":
    key = jax.random.PRNGKey(0)
    k_params, k_x1, k_x2, k_x3 = jax.random.split(key, 4)

    num_hidden_nodes = 32
    w1, b1, w2, b2 = init_fitter_params(k_params, num_hidden_nodes)

    # Small batch: single (1, 128) block path (pad 8 -> 128 lanes).
    batch_small = 8
    x_small = jax.random.uniform(k_x1, (batch_small, 1), jnp.float32)
    y_small = jax.block_until_ready(fitter_forward(x_small, w1, b1, w2, b2))
    y_small_ref = _reference(x_small, w1, b1, w2, b2)
    assert y_small.shape == (batch_small, 1)
    assert jnp.allclose(y_small, y_small_ref, atol=1e-5, rtol=1e-5)

    # Medium batch: ragged tail, still a single dense block.
    batch_med = 640
    x_med = jax.random.uniform(k_x2, (batch_med, 1), jnp.float32)
    y_med = jax.block_until_ready(fitter_forward(x_med, w1, b1, w2, b2))
    y_med_ref = _reference(x_med, w1, b1, w2, b2)
    assert y_med.shape == (batch_med, 1)
    assert jnp.allclose(y_med, y_med_ref, atol=1e-5, rtol=1e-5)

    # Larger batch: exercises the 2-step parallel grid (R = 32 rows, 2 tiles).
    batch_large = 4096
    x_large = jax.random.uniform(k_x3, (batch_large, 1), jnp.float32)
    y_large = jax.block_until_ready(fitter_forward(x_large, w1, b1, w2, b2))
    y_large_ref = _reference(x_large, w1, b1, w2, b2)
    assert y_large.shape == (batch_large, 1)
    assert jnp.allclose(y_large, y_large_ref, atol=1e-5, rtol=1e-5)

    print("KERNEL_OK")
</pallas_src>

<mosaic_0001>
module attributes {stable_mosaic.version = 11 : i64} {
  func.func @_fitter_kernel(%arg0: i32, %arg1: memref<1x128xf32, #tpu.memory_space<vmem>>, %arg2: memref<32xf32, #tpu.memory_space<smem>>, %arg3: memref<32xf32, #tpu.memory_space<smem>>, %arg4: memref<32xf32, #tpu.memory_space<smem>>, %arg5: memref<1xf32, #tpu.memory_space<smem>>, %arg6: memref<1x128xf32, #tpu.memory_space<vmem>>) attributes {dimension_semantics = [#tpu.dimension_semantics<parallel>], iteration_bounds = array<i64: 1>, scalar_prefetch = 0 : i64, scratch_operands = 0 : i64, tpu.core_type = #tpu.core_type<tc>, window_params = [{transform_indices = @transform_0, window_bounds = array<i64: 1, 128>}, {transform_indices = @transform_1, window_bounds = array<i64: 32>}, {transform_indices = @transform_2, window_bounds = array<i64: 32>}, {transform_indices = @transform_3, window_bounds = array<i64: 32>}, {transform_indices = @transform_4, window_bounds = array<i64: 1>}, {transform_indices = @transform_5, window_bounds = array<i64: 1, 128>}]} {
    %c0 = arith.constant 0 : index
    %c0_0 = arith.constant 0 : index
    %0 = vector.load %arg1[%c0, %c0_0] : memref<1x128xf32, #tpu.memory_space<vmem>>, vector<1x128xf32>
    %cst = arith.constant 0.000000e+00 : f32
    %1 = vector.broadcast %cst : f32 to vector<1x128xf32>
    %c0_1 = arith.constant 0 : index
    %2 = memref.load %arg2[%c0_1] : memref<32xf32, #tpu.memory_space<smem>>
    %3 = vector.broadcast %2 : f32 to vector<1x128xf32>
    %4 = arith.mulf %3, %0 : vector<1x128xf32>
    %c0_2 = arith.constant 0 : index
    %5 = memref.load %arg3[%c0_2] : memref<32xf32, #tpu.memory_space<smem>>
    %6 = vector.broadcast %5 : f32 to vector<1x128xf32>
    %7 = arith.addf %4, %6 : vector<1x128xf32>
    %8 = math.tanh %7 : vector<1x128xf32>
    %c0_3 = arith.constant 0 : index
    %9 = memref.load %arg4[%c0_3] : memref<32xf32, #tpu.memory_space<smem>>
    %10 = vector.broadcast %9 : f32 to vector<1x128xf32>
    %11 = arith.mulf %10, %8 : vector<1x128xf32>
    %12 = arith.addf %1, %11 : vector<1x128xf32>
    %c1 = arith.constant 1 : index
    %13 = memref.load %arg2[%c1] : memref<32xf32, #tpu.memory_space<smem>>
    %14 = vector.broadcast %13 : f32 to vector<1x128xf32>
    %15 = arith.mulf %14, %0 : vector<1x128xf32>
    %c1_4 = arith.constant 1 : index
    %16 = memref.load %arg3[%c1_4] : memref<32xf32, #tpu.memory_space<smem>>
    %17 = vector.broadcast %16 : f32 to vector<1x128xf32>
    %18 = arith.addf %15, %17 : vector<1x128xf32>
    %19 = math.tanh %18 : vector<1x128xf32>
    %c1_5 = arith.constant 1 : index
    %20 = memref.load %arg4[%c1_5] : memref<32xf32, #tpu.memory_space<smem>>
    %21 = vector.broadcast %20 : f32 to vector<1x128xf32>
    %22 = arith.mulf %21, %19 : vector<1x128xf32>
    %23 = arith.addf %12, %22 : vector<1x128xf32>
    %c2 = arith.constant 2 : index
    %24 = memref.load %arg2[%c2] : memref<32xf32, #tpu.memory_space<smem>>
    %25 = vector.broadcast %24 : f32 to vector<1x128xf32>
    %26 = arith.mulf %25, %0 : vector<1x128xf32>
    %c2_6 = arith.constant 2 : index
    %27 = memref.load %arg3[%c2_6] : memref<32xf32, #tpu.memory_space<smem>>
    %28 = vector.broadcast %27 : f32 to vector<1x128xf32>
    %29 = arith.addf %26, %28 : vector<1x128xf32>
    %30 = math.tanh %29 : vector<1x128xf32>
    %c2_7 = arith.constant 2 : index
    %31 = memref.load %arg4[%c2_7] : memref<32xf32, #tpu.memory_space<smem>>
    %32 = vector.broadcast %31 : f32 to vector<1x128xf32>
    %33 = arith.mulf %32, %30 : vector<1x128xf32>
    %34 = arith.addf %23, %33 : vector<1x128xf32>
    %c3 = arith.constant 3 : index
    %35 = memref.load %arg2[%c3] : memref<32xf32, #tpu.memory_space<smem>>
    %36 = vector.broadcast %35 : f32 to vector<1x128xf32>
    %37 = arith.mulf %36, %0 : vector<1x128xf32>
    %c3_8 = arith.constant 3 : index
    %38 = memref.load %arg3[%c3_8] : memref<32xf32, #tpu.memory_space<smem>>
    %39 = vector.broadcast %38 : f32 to vector<1x128xf32>
    %40 = arith.addf %37, %39 : vector<1x128xf32>
    %41 = math.tanh %40 : vector<1x128xf32>
    %c3_9 = arith.constant 3 : index
    %42 = memref.load %arg4[%c3_9] : memref<32xf32, #tpu.memory_space<smem>>
    %43 = vector.broadcast %42 : f32 to vector<1x128xf32>
    %44 = arith.mulf %43, %41 : vector<1x128xf32>
    %45 = arith.addf %34, %44 : vector<1x128xf32>
    %c4 = arith.constant 4 : index
    %46 = memref.load %arg2[%c4] : memref<32xf32, #tpu.memory_space<smem>>
    %47 = vector.broadcast %46 : f32 to vector<1x128xf32>
    %48 = arith.mulf %47, %0 : vector<1x128xf32>
    %c4_10 = arith.constant 4 : index
    %49 = memref.load %arg3[%c4_10] : memref<32xf32, #tpu.memory_space<smem>>
    %50 = vector.broadcast %49 : f32 to vector<1x128xf32>
    %51 = arith.addf %48, %50 : vector<1x128xf32>
    %52 = math.tanh %51 : vector<1x128xf32>
    %c4_11 = arith.constant 4 : index
    %53 = memref.load %arg4[%c4_11] : memref<32xf32, #tpu.memory_space<smem>>
    %54 = vector.broadcast %53 : f32 to vector<1x128xf32>
    %55 = arith.mulf %54, %52 : vector<1x128xf32>
    %56 = arith.addf %45, %55 : vector<1x128xf32>
    %c5 = arith.constant 5 : index
    %57 = memref.load %arg2[%c5] : memref<32xf32, #tpu.memory_space<smem>>
    %58 = vector.broadcast %57 : f32 to vector<1x128xf32>
    %59 = arith.mulf %58, %0 : vector<1x128xf32>
    %c5_12 = arith.constant 5 : index
    %60 = memref.load %arg3[%c5_12] : memref<32xf32, #tpu.memory_space<smem>>
    %61 = vector.broadcast %60 : f32 to vector<1x128xf32>
    %62 = arith.addf %59, %61 : vector<1x128xf32>
    %63 = math.tanh %62 : vector<1x128xf32>
    %c5_13 = arith.constant 5 : index
    %64 = memref.load %arg4[%c5_13] : memref<32xf32, #tpu.memory_space<smem>>
    %65 = vector.broadcast %64 : f32 to vector<1x128xf32>
    %66 = arith.mulf %65, %63 : vector<1x128xf32>
    %67 = arith.addf %56, %66 : vector<1x128xf32>
    %c6 = arith.constant 6 : index
    %68 = memref.load %arg2[%c6] : memref<32xf32, #tpu.memory_space<smem>>
    %69 = vector.broadcast %68 : f32 to vector<1x128xf32>
    %70 = arith.mulf %69, %0 : vector<1x128xf32>
    %c6_14 = arith.constant 6 : index
    %71 = memref.load %arg3[%c6_14] : memref<32xf32, #tpu.memory_space<smem>>
    %72 = vector.broadcast %71 : f32 to vector<1x128xf32>
    %73 = arith.addf %70, %72 : vector<1x128xf32>
    %74 = math.tanh %73 : vector<1x128xf32>
    %c6_15 = arith.constant 6 : index
    %75 = memref.load %arg4[%c6_15] : memref<32xf32, #tpu.memory_space<smem>>
    %76 = vector.broadcast %75 : f32 to vector<1x128xf32>
    %77 = arith.mulf %76, %74 : vector<1x128xf32>
    %78 = arith.addf %67, %77 : vector<1x128xf32>
    %c7 = arith.constant 7 : index
    %79 = memref.load %arg2[%c7] : memref<32xf32, #tpu.memory_space<smem>>
    %80 = vector.broadcast %79 : f32 to vector<1x128xf32>
    %81 = arith.mulf %80, %0 : vector<1x128xf32>
    %c7_16 = arith.constant 7 : index
    %82 = memref.load %arg3[%c7_16] : memref<32xf32, #tpu.memory_space<smem>>
    %83 = vector.broadcast %82 : f32 to vector<1x128xf32>
    %84 = arith.addf %81, %83 : vector<1x128xf32>
    %85 = math.tanh %84 : vector<1x128xf32>
    %c7_17 = arith.constant 7 : index
    %86 = memref.load %arg4[%c7_17] : memref<32xf32, #tpu.memory_space<smem>>
    %87 = vector.broadcast %86 : f32 to vector<1x128xf32>
    %88 = arith.mulf %87, %85 : vector<1x128xf32>
    %89 = arith.addf %78, %88 : vector<1x128xf32>
    %c8 = arith.constant 8 : index
    %90 = memref.load %arg2[%c8] : memref<32xf32, #tpu.memory_space<smem>>
    %91 = vector.broadcast %90 : f32 to vector<1x128xf32>
    %92 = arith.mulf %91, %0 : vector<1x128xf32>
    %c8_18 = arith.constant 8 : index
    %93 = memref.load %arg3[%c8_18] : memref<32xf32, #tpu.memory_space<smem>>
    %94 = vector.broadcast %93 : f32 to vector<1x128xf32>
    %95 = arith.addf %92, %94 : vector<1x128xf32>
    %96 = math.tanh %95 : vector<1x128xf32>
    %c8_19 = arith.constant 8 : index
    %97 = memref.load %arg4[%c8_19] : memref<32xf32, #tpu.memory_space<smem>>
    %98 = vector.broadcast %97 : f32 to vector<1x128xf32>
    %99 = arith.mulf %98, %96 : vector<1x128xf32>
    %100 = arith.addf %89, %99 : vector<1x128xf32>
    %c9 = arith.constant 9 : index
    %101 = memref.load %arg2[%c9] : memref<32xf32, #tpu.memory_space<smem>>
    %102 = vector.broadcast %101 : f32 to vector<1x128xf32>
    %103 = arith.mulf %102, %0 : vector<1x128xf32>
    %c9_20 = arith.constant 9 : index
    %104 = memref.load %arg3[%c9_20] : memref<32xf32, #tpu.memory_space<smem>>
    %105 = vector.broadcast %104 : f32 to vector<1x128xf32>
    %106 = arith.addf %103, %105 : vector<1x128xf32>
    %107 = math.tanh %106 : vector<1x128xf32>
    %c9_21 = arith.constant 9 : index
    %108 = memref.load %arg4[%c9_21] : memref<32xf32, #tpu.memory_space<smem>>
    %109 = vector.broadcast %108 : f32 to vector<1x128xf32>
    %110 = arith.mulf %109, %107 : vector<1x128xf32>
    %111 = arith.addf %100, %110 : vector<1x128xf32>
    %c10 = arith.constant 10 : index
    %112 = memref.load %arg2[%c10] : memref<32xf32, #tpu.memory_space<smem>>
    %113 = vector.broadcast %112 : f32 to vector<1x128xf32>
    %114 = arith.mulf %113, %0 : vector<1x128xf32>
    %c10_22 = arith.constant 10 : index
    %115 = memref.load %arg3[%c10_22] : memref<32xf32, #tpu.memory_space<smem>>
    %116 = vector.broadcast %115 : f32 to vector<1x128xf32>
    %117 = arith.addf %114, %116 : vector<1x128xf32>
    %118 = math.tanh %117 : vector<1x128xf32>
    %c10_23 = arith.constant 10 : index
    %119 = memref.load %arg4[%c10_23] : memref<32xf32, #tpu.memory_space<smem>>
    %120 = vector.broadcast %119 : f32 to vector<1x128xf32>
    %121 = arith.mulf %120, %118 : vector<1x128xf32>
    %122 = arith.addf %111, %121 : vector<1x128xf32>
    %c11 = arith.constant 11 : index
    %123 = memref.load %arg2[%c11] : memref<32xf32, #tpu.memory_space<smem>>
    %124 = vector.broadcast %123 : f32 to vector<1x128xf32>
    %125 = arith.mulf %124, %0 : vector<1x128xf32>
    %c11_24 = arith.constant 11 : index
    %126 = memref.load %arg3[%c11_24] : memref<32xf32, #tpu.memory_space<smem>>
    %127 = vector.broadcast %126 : f32 to vector<1x128xf32>
    %128 = arith.addf %125, %127 : vector<1x128xf32>
    %129 = math.tanh %128 : vector<1x128xf32>
    %c11_25 = arith.constant 11 : index
    %130 = memref.load %arg4[%c11_25] : memref<32xf32, #tpu.memory_space<smem>>
    %131 = vector.broadcast %130 : f32 to vector<1x128xf32>
    %132 = arith.mulf %131, %129 : vector<1x128xf32>
    %133 = arith.addf %122, %132 : vector<1x128xf32>
    %c12 = arith.constant 12 : index
    %134 = memref.load %arg2[%c12] : memref<32xf32, #tpu.memory_space<smem>>
    %135 = vector.broadcast %134 : f32 to vector<1x128xf32>
    %136 = arith.mulf %135, %0 : vector<1x128xf32>
    %c12_26 = arith.constant 12 : index
    %137 = memref.load %arg3[%c12_26] : memref<32xf32, #tpu.memory_space<smem>>
    %138 = vector.broadcast %137 : f32 to vector<1x128xf32>
    %139 = arith.addf %136, %138 : vector<1x128xf32>
    %140 = math.tanh %139 : vector<1x128xf32>
    %c12_27 = arith.constant 12 : index
    %141 = memref.load %arg4[%c12_27] : memref<32xf32, #tpu.memory_space<smem>>
    %142 = vector.broadcast %141 : f32 to vector<1x128xf32>
    %143 = arith.mulf %142, %140 : vector<1x128xf32>
    %144 = arith.addf %133, %143 : vector<1x128xf32>
    %c13 = arith.constant 13 : index
    %145 = memref.load %arg2[%c13] : memref<32xf32, #tpu.memory_space<smem>>
    %146 = vector.broadcast %145 : f32 to vector<1x128xf32>
    %147 = arith.mulf %146, %0 : vector<1x128xf32>
    %c13_28 = arith.constant 13 : index
    %148 = memref.load %arg3[%c13_28] : memref<32xf32, #tpu.memory_space<smem>>
    %149 = vector.broadcast %148 : f32 to vector<1x128xf32>
    %150 = arith.addf %147, %149 : vector<1x128xf32>
    %151 = math.tanh %150 : vector<1x128xf32>
    %c13_29 = arith.constant 13 : index
    %152 = memref.load %arg4[%c13_29] : memref<32xf32, #tpu.memory_space<smem>>
    %153 = vector.broadcast %152 : f32 to vector<1x128xf32>
    %154 = arith.mulf %153, %151 : vector<1x128xf32>
    %155 = arith.addf %144, %154 : vector<1x128xf32>
    %c14 = arith.constant 14 : index
    %156 = memref.load %arg2[%c14] : memref<32xf32, #tpu.memory_space<smem>>
    %157 = vector.broadcast %156 : f32 to vector<1x128xf32>
    %158 = arith.mulf %157, %0 : vector<1x128xf32>
    %c14_30 = arith.constant 14 : index
    %159 = memref.load %arg3[%c14_30] : memref<32xf32, #tpu.memory_space<smem>>
    %160 = vector.broadcast %159 : f32 to vector<1x128xf32>
    %161 = arith.addf %158, %160 : vector<1x128xf32>
    %162 = math.tanh %161 : vector<1x128xf32>
    %c14_31 = arith.constant 14 : index
    %163 = memref.load %arg4[%c14_31] : memref<32xf32, #tpu.memory_space<smem>>
    %164 = vector.broadcast %163 : f32 to vector<1x128xf32>
    %165 = arith.mulf %164, %162 : vector<1x128xf32>
    %166 = arith.addf %155, %165 : vector<1x128xf32>
    %c15 = arith.constant 15 : index
    %167 = memref.load %arg2[%c15] : memref<32xf32, #tpu.memory_space<smem>>
    %168 = vector.broadcast %167 : f32 to vector<1x128xf32>
    %169 = arith.mulf %168, %0 : vector<1x128xf32>
    %c15_32 = arith.constant 15 : index
    %170 = memref.load %arg3[%c15_32] : memref<32xf32, #tpu.memory_space<smem>>
    %171 = vector.broadcast %170 : f32 to vector<1x128xf32>
    %172 = arith.addf %169, %171 : vector<1x128xf32>
    %173 = math.tanh %172 : vector<1x128xf32>
    %c15_33 = arith.constant 15 : index
    %174 = memref.load %arg4[%c15_33] : memref<32xf32, #tpu.memory_space<smem>>
    %175 = vector.broadcast %174 : f32 to vector<1x128xf32>
    %176 = arith.mulf %175, %173 : vector<1x128xf32>
    %177 = arith.addf %166, %176 : vector<1x128xf32>
    %c16 = arith.constant 16 : index
    %178 = memref.load %arg2[%c16] : memref<32xf32, #tpu.memory_space<smem>>
    %179 = vector.broadcast %178 : f32 to vector<1x128xf32>
    %180 = arith.mulf %179, %0 : vector<1x128xf32>
    %c16_34 = arith.constant 16 : index
    %181 = memref.load %arg3[%c16_34] : memref<32xf32, #tpu.memory_space<smem>>
    %182 = vector.broadcast %181 : f32 to vector<1x128xf32>
    %183 = arith.addf %180, %182 : vector<1x128xf32>
    %184 = math.tanh %183 : vector<1x128xf32>
    %c16_35 = arith.constant 16 : index
    %185 = memref.load %arg4[%c16_35] : memref<32xf32, #tpu.memory_space<smem>>
    %186 = vector.broadcast %185 : f32 to vector<1x128xf32>
    %187 = arith.mulf %186, %184 : vector<1x128xf32>
    %188 = arith.addf %177, %187 : vector<1x128xf32>
    %c17 = arith.constant 17 : index
    %189 = memref.load %arg2[%c17] : memref<32xf32, #tpu.memory_space<smem>>
    %190 = vector.broadcast %189 : f32 to vector<1x128xf32>
    %191 = arith.mulf %190, %0 : vector<1x128xf32>
    %c17_36 = arith.constant 17 : index
    %192 = memref.load %arg3[%c17_36] : memref<32xf32, #tpu.memory_space<smem>>
    %193 = vector.broadcast %192 : f32 to vector<1x128xf32>
    %194 = arith.addf %191, %193 : vector<1x128xf32>
    %195 = math.tanh %194 : vector<1x128xf32>
    %c17_37 = arith.constant 17 : index
    %196 = memref.load %arg4[%c17_37] : memref<32xf32, #tpu.memory_space<smem>>
    %197 = vector.broadcast %196 : f32 to vector<1x128xf32>
    %198 = arith.mulf %197, %195 : vector<1x128xf32>
    %199 = arith.addf %188, %198 : vector<1x128xf32>
    %c18 = arith.constant 18 : index
    %200 = memref.load %arg2[%c18] : memref<32xf32, #tpu.memory_space<smem>>
    %201 = vector.broadcast %200 : f32 to vector<1x128xf32>
    %202 = arith.mulf %201, %0 : vector<1x128xf32>
    %c18_38 = arith.constant 18 : index
    %203 = memref.load %arg3[%c18_38] : memref<32xf32, #tpu.memory_space<smem>>
    %204 = vector.broadcast %203 : f32 to vector<1x128xf32>
    %205 = arith.addf %202, %204 : vector<1x128xf32>
    %206 = math.tanh %205 : vector<1x128xf32>
    %c18_39 = arith.constant 18 : index
    %207 = memref.load %arg4[%c18_39] : memref<32xf32, #tpu.memory_space<smem>>
    %208 = vector.broadcast %207 : f32 to vector<1x128xf32>
    %209 = arith.mulf %208, %206 : vector<1x128xf32>
    %210 = arith.addf %199, %209 : vector<1x128xf32>
    %c19 = arith.constant 19 : index
    %211 = memref.load %arg2[%c19] : memref<32xf32, #tpu.memory_space<smem>>
    %212 = vector.broadcast %211 : f32 to vector<1x128xf32>
    %213 = arith.mulf %212, %0 : vector<1x128xf32>
    %c19_40 = arith.constant 19 : index
    %214 = memref.load %arg3[%c19_40] : memref<32xf32, #tpu.memory_space<smem>>
    %215 = vector.broadcast %214 : f32 to vector<1x128xf32>
    %216 = arith.addf %213, %215 : vector<1x128xf32>
    %217 = math.tanh %216 : vector<1x128xf32>
    %c19_41 = arith.constant 19 : index
    %218 = memref.load %arg4[%c19_41] : memref<32xf32, #tpu.memory_space<smem>>
    %219 = vector.broadcast %218 : f32 to vector<1x128xf32>
    %220 = arith.mulf %219, %217 : vector<1x128xf32>
    %221 = arith.addf %210, %220 : vector<1x128xf32>
    %c20 = arith.constant 20 : index
    %222 = memref.load %arg2[%c20] : memref<32xf32, #tpu.memory_space<smem>>
    %223 = vector.broadcast %222 : f32 to vector<1x128xf32>
    %224 = arith.mulf %223, %0 : vector<1x128xf32>
    %c20_42 = arith.constant 20 : index
    %225 = memref.load %arg3[%c20_42] : memref<32xf32, #tpu.memory_space<smem>>
    %226 = vector.broadcast %225 : f32 to vector<1x128xf32>
    %227 = arith.addf %224, %226 : vector<1x128xf32>
    %228 = math.tanh %227 : vector<1x128xf32>
    %c20_43 = arith.constant 20 : index
    %229 = memref.load %arg4[%c20_43] : memref<32xf32, #tpu.memory_space<smem>>
    %230 = vector.broadcast %229 : f32 to vector<1x128xf32>
    %231 = arith.mulf %230, %228 : vector<1x128xf32>
    %232 = arith.addf %221, %231 : vector<1x128xf32>
    %c21 = arith.constant 21 : index
    %233 = memref.load %arg2[%c21] : memref<32xf32, #tpu.memory_space<smem>>
    %234 = vector.broadcast %233 : f32 to vector<1x128xf32>
    %235 = arith.mulf %234, %0 : vector<1x128xf32>
    %c21_44 = arith.constant 21 : index
    %236 = memref.load %arg3[%c21_44] : memref<32xf32, #tpu.memory_space<smem>>
    %237 = vector.broadcast %236 : f32 to vector<1x128xf32>
    %238 = arith.addf %235, %237 : vector<1x128xf32>
    %239 = math.tanh %238 : vector<1x128xf32>
    %c21_45 = arith.constant 21 : index
    %240 = memref.load %arg4[%c21_45] : memref<32xf32, #tpu.memory_space<smem>>
    %241 = vector.broadcast %240 : f32 to vector<1x128xf32>
    %242 = arith.mulf %241, %239 : vector<1x128xf32>
    %243 = arith.addf %232, %242 : vector<1x128xf32>
    %c22 = arith.constant 22 : index
    %244 = memref.load %arg2[%c22] : memref<32xf32, #tpu.memory_space<smem>>
    %245 = vector.broadcast %244 : f32 to vector<1x128xf32>
    %246 = arith.mulf %245, %0 : vector<1x128xf32>
    %c22_46 = arith.constant 22 : index
    %247 = memref.load %arg3[%c22_46] : memref<32xf32, #tpu.memory_space<smem>>
    %248 = vector.broadcast %247 : f32 to vector<1x128xf32>
    %249 = arith.addf %246, %248 : vector<1x128xf32>
    %250 = math.tanh %249 : vector<1x128xf32>
    %c22_47 = arith.constant 22 : index
    %251 = memref.load %arg4[%c22_47] : memref<32xf32, #tpu.memory_space<smem>>
    %252 = vector.broadcast %251 : f32 to vector<1x128xf32>
    %253 = arith.mulf %252, %250 : vector<1x128xf32>
    %254 = arith.addf %243, %253 : vector<1x128xf32>
    %c23 = arith.constant 23 : index
    %255 = memref.load %arg2[%c23] : memref<32xf32, #tpu.memory_space<smem>>
    %256 = vector.broadcast %255 : f32 to vector<1x128xf32>
    %257 = arith.mulf %256, %0 : vector<1x128xf32>
    %c23_48 = arith.constant 23 : index
    %258 = memref.load %arg3[%c23_48] : memref<32xf32, #tpu.memory_space<smem>>
    %259 = vector.broadcast %258 : f32 to vector<1x128xf32>
    %260 = arith.addf %257, %259 : vector<1x128xf32>
    %261 = math.tanh %260 : vector<1x128xf32>
    %c23_49 = arith.constant 23 : index
    %262 = memref.load %arg4[%c23_49] : memref<32xf32, #tpu.memory_space<smem>>
    %263 = vector.broadcast %262 : f32 to vector<1x128xf32>
    %264 = arith.mulf %263, %261 : vector<1x128xf32>
    %265 = arith.addf %254, %264 : vector<1x128xf32>
    %c24 = arith.constant 24 : index
    %266 = memref.load %arg2[%c24] : memref<32xf32, #tpu.memory_space<smem>>
    %267 = vector.broadcast %266 : f32 to vector<1x128xf32>
    %268 = arith.mulf %267, %0 : vector<1x128xf32>
    %c24_50 = arith.constant 24 : index
    %269 = memref.load %arg3[%c24_50] : memref<32xf32, #tpu.memory_space<smem>>
    %270 = vector.broadcast %269 : f32 to vector<1x128xf32>
    %271 = arith.addf %268, %270 : vector<1x128xf32>
    %272 = math.tanh %271 : vector<1x128xf32>
    %c24_51 = arith.constant 24 : index
    %273 = memref.load %arg4[%c24_51] : memref<32xf32, #tpu.memory_space<smem>>
    %274 = vector.broadcast %273 : f32 to vector<1x128xf32>
    %275 = arith.mulf %274, %272 : vector<1x128xf32>
    %276 = arith.addf %265, %275 : vector<1x128xf32>
    %c25 = arith.constant 25 : index
    %277 = memref.load %arg2[%c25] : memref<32xf32, #tpu.memory_space<smem>>
    %278 = vector.broadcast %277 : f32 to vector<1x128xf32>
    %279 = arith.mulf %278, %0 : vector<1x128xf32>
    %c25_52 = arith.constant 25 : index
    %280 = memref.load %arg3[%c25_52] : memref<32xf32, #tpu.memory_space<smem>>
    %281 = vector.broadcast %280 : f32 to vector<1x128xf32>
    %282 = arith.addf %279, %281 : vector<1x128xf32>
    %283 = math.tanh %282 : vector<1x128xf32>
    %c25_53 = arith.constant 25 : index
    %284 = memref.load %arg4[%c25_53] : memref<32xf32, #tpu.memory_space<smem>>
    %285 = vector.broadcast %284 : f32 to vector<1x128xf32>
    %286 = arith.mulf %285, %283 : vector<1x128xf32>
    %287 = arith.addf %276, %286 : vector<1x128xf32>
    %c26 = arith.constant 26 : index
    %288 = memref.load %arg2[%c26] : memref<32xf32, #tpu.memory_space<smem>>
    %289 = vector.broadcast %288 : f32 to vector<1x128xf32>
    %290 = arith.mulf %289, %0 : vector<1x128xf32>
    %c26_54 = arith.constant 26 : index
    %291 = memref.load %arg3[%c26_54] : memref<32xf32, #tpu.memory_space<smem>>
    %292 = vector.broadcast %291 : f32 to vector<1x128xf32>
    %293 = arith.addf %290, %292 : vector<1x128xf32>
    %294 = math.tanh %293 : vector<1x128xf32>
    %c26_55 = arith.constant 26 : index
    %295 = memref.load %arg4[%c26_55] : memref<32xf32, #tpu.memory_space<smem>>
    %296 = vector.broadcast %295 : f32 to vector<1x128xf32>
    %297 = arith.mulf %296, %294 : vector<1x128xf32>
    %298 = arith.addf %287, %297 : vector<1x128xf32>
    %c27 = arith.constant 27 : index
    %299 = memref.load %arg2[%c27] : memref<32xf32, #tpu.memory_space<smem>>
    %300 = vector.broadcast %299 : f32 to vector<1x128xf32>
    %301 = arith.mulf %300, %0 : vector<1x128xf32>
    %c27_56 = arith.constant 27 : index
    %302 = memref.load %arg3[%c27_56] : memref<32xf32, #tpu.memory_space<smem>>
    %303 = vector.broadcast %302 : f32 to vector<1x128xf32>
    %304 = arith.addf %301, %303 : vector<1x128xf32>
    %305 = math.tanh %304 : vector<1x128xf32>
    %c27_57 = arith.constant 27 : index
    %306 = memref.load %arg4[%c27_57] : memref<32xf32, #tpu.memory_space<smem>>
    %307 = vector.broadcast %306 : f32 to vector<1x128xf32>
    %308 = arith.mulf %307, %305 : vector<1x128xf32>
    %309 = arith.addf %298, %308 : vector<1x128xf32>
    %c28 = arith.constant 28 : index
    %310 = memref.load %arg2[%c28] : memref<32xf32, #tpu.memory_space<smem>>
    %311 = vector.broadcast %310 : f32 to vector<1x128xf32>
    %312 = arith.mulf %311, %0 : vector<1x128xf32>
    %c28_58 = arith.constant 28 : index
    %313 = memref.load %arg3[%c28_58] : memref<32xf32, #tpu.memory_space<smem>>
    %314 = vector.broadcast %313 : f32 to vector<1x128xf32>
    %315 = arith.addf %312, %314 : vector<1x128xf32>
    %316 = math.tanh %315 : vector<1x128xf32>
    %c28_59 = arith.constant 28 : index
    %317 = memref.load %arg4[%c28_59] : memref<32xf32, #tpu.memory_space<smem>>
    %318 = vector.broadcast %317 : f32 to vector<1x128xf32>
    %319 = arith.mulf %318, %316 : vector<1x128xf32>
    %320 = arith.addf %309, %319 : vector<1x128xf32>
    %c29 = arith.constant 29 : index
    %321 = memref.load %arg2[%c29] : memref<32xf32, #tpu.memory_space<smem>>
    %322 = vector.broadcast %321 : f32 to vector<1x128xf32>
    %323 = arith.mulf %322, %0 : vector<1x128xf32>
    %c29_60 = arith.constant 29 : index
    %324 = memref.load %arg3[%c29_60] : memref<32xf32, #tpu.memory_space<smem>>
    %325 = vector.broadcast %324 : f32 to vector<1x128xf32>
    %326 = arith.addf %323, %325 : vector<1x128xf32>
    %327 = math.tanh %326 : vector<1x128xf32>
    %c29_61 = arith.constant 29 : index
    %328 = memref.load %arg4[%c29_61] : memref<32xf32, #tpu.memory_space<smem>>
    %329 = vector.broadcast %328 : f32 to vector<1x128xf32>
    %330 = arith.mulf %329, %327 : vector<1x128xf32>
    %331 = arith.addf %320, %330 : vector<1x128xf32>
    %c30 = arith.constant 30 : index
    %332 = memref.load %arg2[%c30] : memref<32xf32, #tpu.memory_space<smem>>
    %333 = vector.broadcast %332 : f32 to vector<1x128xf32>
    %334 = arith.mulf %333, %0 : vector<1x128xf32>
    %c30_62 = arith.constant 30 : index
    %335 = memref.load %arg3[%c30_62] : memref<32xf32, #tpu.memory_space<smem>>
    %336 = vector.broadcast %335 : f32 to vector<1x128xf32>
    %337 = arith.addf %334, %336 : vector<1x128xf32>
    %338 = math.tanh %337 : vector<1x128xf32>
    %c30_63 = arith.constant 30 : index
    %339 = memref.load %arg4[%c30_63] : memref<32xf32, #tpu.memory_space<smem>>
    %340 = vector.broadcast %339 : f32 to vector<1x128xf32>
    %341 = arith.mulf %340, %338 : vector<1x128xf32>
    %342 = arith.addf %331, %341 : vector<1x128xf32>
    %c31 = arith.constant 31 : index
    %343 = memref.load %arg2[%c31] : memref<32xf32, #tpu.memory_space<smem>>
    %344 = vector.broadcast %343 : f32 to vector<1x128xf32>
    %345 = arith.mulf %344, %0 : vector<1x128xf32>
    %c31_64 = arith.constant 31 : index
    %346 = memref.load %arg3[%c31_64] : memref<32xf32, #tpu.memory_space<smem>>
    %347 = vector.broadcast %346 : f32 to vector<1x128xf32>
    %348 = arith.addf %345, %347 : vector<1x128xf32>
    %349 = math.tanh %348 : vector<1x128xf32>
    %c31_65 = arith.constant 31 : index
    %350 = memref.load %arg4[%c31_65] : memref<32xf32, #tpu.memory_space<smem>>
    %351 = vector.broadcast %350 : f32 to vector<1x128xf32>
    %352 = arith.mulf %351, %349 : vector<1x128xf32>
    %353 = arith.addf %342, %352 : vector<1x128xf32>
    %c0_66 = arith.constant 0 : index
    %354 = memref.load %arg5[%c0_66] : memref<1xf32, #tpu.memory_space<smem>>
    %355 = vector.broadcast %354 : f32 to vector<1x128xf32>
    %356 = arith.addf %353, %355 : vector<1x128xf32>
    %c0_67 = arith.constant 0 : index
    %c0_68 = arith.constant 0 : index
    %357 = vector.load %arg6[%c0_67, %c0_68] : memref<1x128xf32, #tpu.memory_space<vmem>>, vector<1x128xf32>
    tpu.vector_store %arg6[%c0_67, %c0_68], %356 {strides = array<i32>} : memref<1x128xf32, #tpu.memory_space<vmem>>, vector<1x128xf32>,
    return
  }
  func.func @transform_0(%arg0: i32) -> (i32, i32) {
    %c0_i32 = arith.constant 0 : i32
    %c0_i32_0 = arith.constant 0 : i32
    return %arg0, %c0_i32 : i32, i32
  }
  func.func @transform_1(%arg0: i32) -> i32 {
    %c0_i32 = arith.constant 0 : i32
    %c0_i32_0 = arith.constant 0 : i32
    return %c0_i32 : i32
  }
  func.func @transform_2(%arg0: i32) -> i32 {
    %c0_i32 = arith.constant 0 : i32
    %c0_i32_0 = arith.constant 0 : i32
    return %c0_i32 : i32
  }
  func.func @transform_3(%arg0: i32) -> i32 {
    %c0_i32 = arith.constant 0 : i32
    %c0_i32_0 = arith.constant 0 : i32
    return %c0_i32 : i32
  }
  func.func @transform_4(%arg0: i32) -> i32 {
    %c0_i32 = arith.constant 0 : i32
    %c0_i32_0 = arith.constant 0 : i32
    return %c0_i32 : i32
  }
  func.func @transform_5(%arg0: i32) -> (i32, i32) {
    %c0_i32 = arith.constant 0 : i32
    %c0_i32_0 = arith.constant 0 : i32
    return %arg0, %c0_i32 : i32, i32
  }
}

</mosaic_0001>

<llo_original>
// kernel: tpu_custom_call.1
$region0: #{tpu_custom_call.1}
  #allocation0 [shape = 'u32[]', space=smem, size = 0x4, offset = 0x4, fixed_abs, tag = 'smem constant byte address 0x4 - core index']
  #allocation1 [shape = 'u32[72,128]{1,0:T(1,128)}', space=vmem, size = 0x9000, scoped, tag = 'internal scratch']
  #allocation2 [shape = 'f32[1]{0:T(128)S(6)}', space=smem, size = 0x200, scoped, tag = 'scoped memory for tpu_custom_call.1']
  %s0 = inlined_call_operand.vmem [shape: f32[1,128], index: 0, kind: input, shape index: {}]
  %s1 = inlined_call_operand.vmem [shape: f32[32], index: 1, kind: input, shape index: {}]
  %s2 = inlined_call_operand.vmem [shape: f32[32], index: 2, kind: input, shape index: {}]
  %s3 = inlined_call_operand.vmem [shape: f32[32], index: 3, kind: input, shape index: {}]
  %s4 = inlined_call_operand.<no memory space> [shape: f32[1], index: 4, kind: input, shape index: {}]
  %s5 = inlined_call_operand.hbm [shape: f32[1,128], index: 5, kind: output, shape index: {}]
  %s6 = sld [smem:[#allocation0]]
  $region42: #{tpu_custom_call.1} parent=0
    _
  %s8 = ssub.s32 1, %s6
  %s9 = scalar_select 0, %s8, %s6
  %10 = sst [smem:[#allocation2]] %s4
  $region1: #{tpu_custom_call.1} parent=0
    #allocation3 [shape = 'u8[512]{0}', space=smem, size = 0x200, scoped, tag = 'input window, operand 1, single buffered']
    #allocation4 [shape = 's32[1]{0}', space=sflag, size = 0x4, scoped, tag = 'scoped memory for tpu_custom_call.1']
    #allocation5 [shape = 's32[1]{0}', space=sflag, size = 0x4, scoped, tag = 'scoped memory for tpu_custom_call.1']
    #allocation6 [shape = 'u8[512]{0}', space=smem, size = 0x200, scoped, tag = 'input window, operand 2, single buffered']
    #allocation7 [shape = 's32[1]{0}', space=sflag, size = 0x4, scoped, tag = 'scoped memory for tpu_custom_call.1']
    #allocation8 [shape = 'u8[512]{0}', space=smem, size = 0x200, scoped, tag = 'input window, operand 3, single buffered']
    #allocation9 [shape = 'u8[512]{0}', space=vmem, size = 0x400, scoped, tag = 'output window, operand 0, single buffered']
    %11 = vsyncpa [#allocation5], 0
    %12 = vsyncpa [#allocation7], 0
    %13 = vsyncpa [#allocation4], 0
    // Predicated region
    $region2: #{tpu_custom_call.1} parent=1 // pred_check
      _
    $region3: #{tpu_custom_call.1} parent=1 // pred_check_branch
      %15 = sbr.rel (0) target = $region5
    $region4: #{tpu_custom_call.1} parent=1 // pred_region
      _
    $region5: #{tpu_custom_call.1} parent=1 // pred_fallthru
      _
    // Predicated region
    $region6: #{tpu_custom_call.1} parent=1 // pred_check
      _
    $region7: #{tpu_custom_call.1} parent=1 // pred_check_branch
      %17 = sbr.rel (0) target = $region9
    $region8: #{tpu_custom_call.1} parent=1 // pred_region
      %19 = vsyncadd [#allocation5], 0
      %s21 = sshll.u32 %s1, 4
      %s22 = int_to_ptr.vmem [resolvable:$true] %s21
      %24 = dma.vmem_to_smem %s22, 16, [#allocation3], [#allocation5]
    $region9: #{tpu_custom_call.1} parent=1 // pred_fallthru
      _
    // Predicated region
    $region10: #{tpu_custom_call.1} parent=1 // pred_check
      _
    $region11: #{tpu_custom_call.1} parent=1 // pred_check_branch
      %26 = sbr.rel (0) target = $region13
    $region12: #{tpu_custom_call.1} parent=1 // pred_region
      %28 = vsyncadd [#allocation7], 0
      %s30 = sshll.u32 %s2, 4
      %s31 = int_to_ptr.vmem [resolvable:$true] %s30
      %33 = dma.vmem_to_smem %s31, 16, [#allocation6], [#allocation7]
    $region13: #{tpu_custom_call.1} parent=1 // pred_fallthru
      _
    // Predicated region
    $region14: #{tpu_custom_call.1} parent=1 // pred_check
      _
    $region15: #{tpu_custom_call.1} parent=1 // pred_check_branch
      %35 = sbr.rel (0) target = $region17
    $region16: #{tpu_custom_call.1} parent=1 // pred_region
      %37 = vsyncadd [#allocation7], 0
      %s39 = sshll.u32 %s3, 4
      %s40 = int_to_ptr.vmem [resolvable:$true] %s39
      %42 = dma.vmem_to_smem %s40, 16, [#allocation8], [#allocation7]
    $region17: #{tpu_custom_call.1} parent=1 // pred_fallthru
      _
    // Predicated region
    $region18: #{tpu_custom_call.1} parent=1 // pred_check
      _
    $region19: #{tpu_custom_call.1} parent=1 // pred_check_branch
      %44 = sbr.rel (0) target = $region21
    $region20: #{tpu_custom_call.1} parent=1 // pred_region
      _
    $region21: #{tpu_custom_call.1} parent=1 // pred_fallthru
      _
    // Predicated region
    $region22: #{tpu_custom_call.1} parent=1 // pred_check
      _
    $region23: #{tpu_custom_call.1} parent=1 // pred_check_branch
      %46 = sbr.rel (0) target = $region25
    $region24: #{tpu_custom_call.1} parent=1 // pred_region
      %48 = dma.done [#allocation5], 16
    $region25: #{tpu_custom_call.1} parent=1 // pred_fallthru
      _
    // Predicated region
    $region26: #{tpu_custom_call.1} parent=1 // pred_check
      _
    $region27: #{tpu_custom_call.1} parent=1 // pred_check_branch
      %50 = sbr.rel (0) target = $region29
    $region28: #{tpu_custom_call.1} parent=1 // pred_region
      %52 = dma.done [#allocation7], 16
    $region29: #{tpu_custom_call.1} parent=1 // pred_fallthru
      _
    // Predicated region
    $region30: #{tpu_custom_call.1} parent=1 // pred_check
      _
    $region31: #{tpu_custom_call.1} parent=1 // pred_check_branch
      %54 = sbr.rel (0) target = $region33
    $region32: #{tpu_custom_call.1} parent=1 // pred_region
      %56 = dma.done [#allocation7], 16
    $region33: #{tpu_custom_call.1} parent=1 // pred_fallthru
      _
    %57 = sfence
    %v58 = vld [vmem:[%s0] sm:$0x1]
    %s59 = sld [smem:[#allocation3]]
    %v60 = vstv %s59
    %v61 = vmul.f32 %v60, %v58
    %s62 = sld [smem:[#allocation6]]
    %v63 = vstv %s62
    %v64 = vadd.f32 %v61, %v63
    %v65 = vtanh.pop %v64
    %s66 = sld [smem:[#allocation8]]
    %v67 = vstv %s66
    %v68 = vmul.f32 %v67, %v65
    %v69 = vadd.f32 %v68, 0.0
    %s70 = sld [smem:[#allocation3 + $0x1]]
    %v71 = vstv %s70
    %v72 = vmul.f32 %v71, %v58
    %s73 = sld [smem:[#allocation6 + $0x1]]
    %v74 = vstv %s73
    %v75 = vadd.f32 %v72, %v74
    %v76 = vtanh.pop %v75
    %s77 = sld [smem:[#allocation8 + $0x1]]
    %v78 = vstv %s77
    %v79 = vmul.f32 %v78, %v76
    %v80 = vadd.f32 %v69, %v79
    %s81 = sld [smem:[#allocation3 + $0x2]]
    %v82 = vstv %s81
    %v83 = vmul.f32 %v82, %v58
    %s84 = sld [smem:[#allocation6 + $0x2]]
    %v85 = vstv %s84
    %v86 = vadd.f32 %v83, %v85
    %v87 = vtanh.pop %v86
    %s88 = sld [smem:[#allocation8 + $0x2]]
    %v89 = vstv %s88
    %v90 = vmul.f32 %v89, %v87
    %v91 = vadd.f32 %v80, %v90
    %s92 = sld [smem:[#allocation3 + $0x3]]
    %v93 = vstv %s92
    %v94 = vmul.f32 %v93, %v58
    %s95 = sld [smem:[#allocation6 + $0x3]]
    %v96 = vstv %s95
    %v97 = vadd.f32 %v94, %v96
    %v98 = vtanh.pop %v97
    %s99 = sld [smem:[#allocation8 + $0x3]]
    %v100 = vstv %s99
    %v101 = vmul.f32 %v100, %v98
    %v102 = vadd.f32 %v91, %v101
    %s103 = sld [smem:[#allocation3 + $0x4]]
    %v104 = vstv %s103
    %v105 = vmul.f32 %v104, %v58
    %s106 = sld [smem:[#allocation6 + $0x4]]
    %v107 = vstv %s106
    %v108 = vadd.f32 %v105, %v107
    %v109 = vtanh.pop %v108
    %s110 = sld [smem:[#allocation8 + $0x4]]
    %v111 = vstv %s110
    %v112 = vmul.f32 %v111, %v109
    %v113 = vadd.f32 %v102, %v112
    %s114 = sld [smem:[#allocation3 + $0x5]]
    %v115 = vstv %s114
    %v116 = vmul.f32 %v115, %v58
    %s117 = sld [smem:[#allocation6 + $0x5]]
    %v118 = vstv %s117
    %v119 = vadd.f32 %v116, %v118
    %v120 = vtanh.pop %v119
    %s121 = sld [smem:[#allocation8 + $0x5]]
    %v122 = vstv %s121
    %v123 = vmul.f32 %v122, %v120
    %v124 = vadd.f32 %v113, %v123
    %s125 = sld [smem:[#allocation3 + $0x6]]
    %v126 = vstv %s125
    %v127 = vmul.f32 %v126, %v58
    %s128 = sld [smem:[#allocation6 + $0x6]]
    %v129 = vstv %s128
    %v130 = vadd.f32 %v127, %v129
    %v131 = vtanh.pop %v130
    %s132 = sld [smem:[#allocation8 + $0x6]]
    %v133 = vstv %s132
    %v134 = vmul.f32 %v133, %v131
    %v135 = vadd.f32 %v124, %v134
    %s136 = sld [smem:[#allocation3 + $0x7]]
    %v137 = vstv %s136
    %v138 = vmul.f32 %v137, %v58
    %s139 = sld [smem:[#allocation6 + $0x7]]
    %v140 = vstv %s139
    %v141 = vadd.f32 %v138, %v140
    %v142 = vtanh.pop %v141
    %s143 = sld [smem:[#allocation8 + $0x7]]
    %v144 = vstv %s143
    %v145 = vmul.f32 %v144, %v142
    %v146 = vadd.f32 %v135, %v145
    %s147 = sld [smem:[#allocation3 + $0x8]]
    %v148 = vstv %s147
    %v149 = vmul.f32 %v148, %v58
    %s150 = sld [smem:[#allocation6 + $0x8]]
    %v151 = vstv %s150
    %v152 = vadd.f32 %v149, %v151
    %v153 = vtanh.pop %v152
    %s154 = sld [smem:[#allocation8 + $0x8]]
    %v155 = vstv %s154
    %v156 = vmul.f32 %v155, %v153
    %v157 = vadd.f32 %v146, %v156
    %s158 = sld [smem:[#allocation3 + $0x9]]
    %v159 = vstv %s158
    %v160 = vmul.f32 %v159, %v58
    %s161 = sld [smem:[#allocation6 + $0x9]]
    %v162 = vstv %s161
    %v163 = vadd.f32 %v160, %v162
    %v164 = vtanh.pop %v163
    %s165 = sld [smem:[#allocation8 + $0x9]]
    %v166 = vstv %s165
    %v167 = vmul.f32 %v166, %v164
    %v168 = vadd.f32 %v157, %v167
    %s169 = sld [smem:[#allocation3 + $0xa]]
    %v170 = vstv %s169
    %v171 = vmul.f32 %v170, %v58
    %s172 = sld [smem:[#allocation6 + $0xa]]
    %v173 = vstv %s172
    %v174 = vadd.f32 %v171, %v173
    %v175 = vtanh.pop %v174
    %s176 = sld [smem:[#allocation8 + $0xa]]
    %v177 = vstv %s176
    %v178 = vmul.f32 %v177, %v175
    %v179 = vadd.f32 %v168, %v178
    %s180 = sld [smem:[#allocation3 + $0xb]]
    %v181 = vstv %s180
    %v182 = vmul.f32 %v181, %v58
    %s183 = sld [smem:[#allocation6 + $0xb]]
    %v184 = vstv %s183
    %v185 = vadd.f32 %v182, %v184
    %v186 = vtanh.pop %v185
    %s187 = sld [smem:[#allocation8 + $0xb]]
    %v188 = vstv %s187
    %v189 = vmul.f32 %v188, %v186
    %v190 = vadd.f32 %v179, %v189
    %s191 = sld [smem:[#allocation3 + $0xc]]
    %v192 = vstv %s191
    %v193 = vmul.f32 %v192, %v58
    %s194 = sld [smem:[#allocation6 + $0xc]]
    %v195 = vstv %s194
    %v196 = vadd.f32 %v193, %v195
    %v197 = vtanh.pop %v196
    %s198 = sld [smem:[#allocation8 + $0xc]]
    %v199 = vstv %s198
    %v200 = vmul.f32 %v199, %v197
    %v201 = vadd.f32 %v190, %v200
    %s202 = sld [smem:[#allocation3 + $0xd]]
    %v203 = vstv %s202
    %v204 = vmul.f32 %v203, %v58
    %s205 = sld [smem:[#allocation6 + $0xd]]
    %v206 = vstv %s205
    %v207 = vadd.f32 %v204, %v206
    %v208 = vtanh.pop %v207
    %s209 = sld [smem:[#allocation8 + $0xd]]
    %v210 = vstv %s209
    %v211 = vmul.f32 %v210, %v208
    %v212 = vadd.f32 %v201, %v211
    %s213 = sld [smem:[#allocation3 + $0xe]]
    %v214 = vstv %s213
    %v215 = vmul.f32 %v214, %v58
    %s216 = sld [smem:[#allocation6 + $0xe]]
    %v217 = vstv %s216
    %v218 = vadd.f32 %v215, %v217
    %v219 = vtanh.pop %v218
    %s220 = sld [smem:[#allocation8 + $0xe]]
    %v221 = vstv %s220
    %v222 = vmul.f32 %v221, %v219
    %v223 = vadd.f32 %v212, %v222
    %s224 = sld [smem:[#allocation3 + $0xf]]
    %v225 = vstv %s224
    %v226 = vmul.f32 %v225, %v58
    %s227 = sld [smem:[#allocation6 + $0xf]]
    %v228 = vstv %s227
    %v229 = vadd.f32 %v226, %v228
    %v230 = vtanh.pop %v229
    %s231 = sld [smem:[#allocation8 + $0xf]]
    %v232 = vstv %s231
    %v233 = vmul.f32 %v232, %v230
    %v234 = vadd.f32 %v223, %v233
    %s235 = sld [smem:[#allocation3 + $0x10]]
    %v236 = vstv %s235
    %v237 = vmul.f32 %v236, %v58
    %s238 = sld [smem:[#allocation6 + $0x10]]
    %v239 = vstv %s238
    %v240 = vadd.f32 %v237, %v239
    %v241 = vtanh.pop %v240
    %s242 = sld [smem:[#allocation8 + $0x10]]
    %v243 = vstv %s242
    %v244 = vmul.f32 %v243, %v241
    %v245 = vadd.f32 %v234, %v244
    %s246 = sld [smem:[#allocation3 + $0x11]]
    %v247 = vstv %s246
    %v248 = vmul.f32 %v247, %v58
    %s249 = sld [smem:[#allocation6 + $0x11]]
    %v250 = vstv %s249
    %v251 = vadd.f32 %v248, %v250
    %v252 = vtanh.pop %v251
    %s253 = sld [smem:[#allocation8 + $0x11]]
    %v254 = vstv %s253
    %v255 = vmul.f32 %v254, %v252
    %v256 = vadd.f32 %v245, %v255
    %s257 = sld [smem:[#allocation3 + $0x12]]
    %v258 = vstv %s257
    %v259 = vmul.f32 %v258, %v58
    %s260 = sld [smem:[#allocation6 + $0x12]]
    %v261 = vstv %s260
    %v262 = vadd.f32 %v259, %v261
    %v263 = vtanh.pop %v262
    %s264 = sld [smem:[#allocation8 + $0x12]]
    %v265 = vstv %s264
    %v266 = vmul.f32 %v265, %v263
    %v267 = vadd.f32 %v256, %v266
    %s268 = sld [smem:[#allocation3 + $0x13]]
    %v269 = vstv %s268
    %v270 = vmul.f32 %v269, %v58
    %s271 = sld [smem:[#allocation6 + $0x13]]
    %v272 = vstv %s271
    %v273 = vadd.f32 %v270, %v272
    %v274 = vtanh.pop %v273
    %s275 = sld [smem:[#allocation8 + $0x13]]
    %v276 = vstv %s275
    %v277 = vmul.f32 %v276, %v274
    %v278 = vadd.f32 %v267, %v277
    %s279 = sld [smem:[#allocation3 + $0x14]]
    %v280 = vstv %s279
    %v281 = vmul.f32 %v280, %v58
    %s282 = sld [smem:[#allocation6 + $0x14]]
    %v283 = vstv %s282
    %v284 = vadd.f32 %v281, %v283
    %v285 = vtanh.pop %v284
    %s286 = sld [smem:[#allocation8 + $0x14]]
    %v287 = vstv %s286
    %v288 = vmul.f32 %v287, %v285
    %v289 = vadd.f32 %v278, %v288
    %s290 = sld [smem:[#allocation3 + $0x15]]
    %v291 = vstv %s290
    %v292 = vmul.f32 %v291, %v58
    %s293 = sld [smem:[#allocation6 + $0x15]]
    %v294 = vstv %s293
    %v295 = vadd.f32 %v292, %v294
    %v296 = vtanh.pop %v295
    %s297 = sld [smem:[#allocation8 + $0x15]]
    %v298 = vstv %s297
    %v299 = vmul.f32 %v298, %v296
    %v300 = vadd.f32 %v289, %v299
    %s301 = sld [smem:[#allocation3 + $0x16]]
    %v302 = vstv %s301
    %v303 = vmul.f32 %v302, %v58
    %s304 = sld [smem:[#allocation6 + $0x16]]
    %v305 = vstv %s304
    %v306 = vadd.f32 %v303, %v305
    %v307 = vtanh.pop %v306
    %s308 = sld [smem:[#allocation8 + $0x16]]
    %v309 = vstv %s308
    %v310 = vmul.f32 %v309, %v307
    %v311 = vadd.f32 %v300, %v310
    %s312 = sld [smem:[#allocation3 + $0x17]]
    %v313 = vstv %s312
    %v314 = vmul.f32 %v313, %v58
    %s315 = sld [smem:[#allocation6 + $0x17]]
    %v316 = vstv %s315
    %v317 = vadd.f32 %v314, %v316
    %v318 = vtanh.pop %v317
    %s319 = sld [smem:[#allocation8 + $0x17]]
    %v320 = vstv %s319
    %v321 = vmul.f32 %v320, %v318
    %v322 = vadd.f32 %v311, %v321
    %s323 = sld [smem:[#allocation3 + $0x18]]
    %v324 = vstv %s323
    %v325 = vmul.f32 %v324, %v58
    %s326 = sld [smem:[#allocation6 + $0x18]]
    %v327 = vstv %s326
    %v328 = vadd.f32 %v325, %v327
    %v329 = vtanh.pop %v328
    %s330 = sld [smem:[#allocation8 + $0x18]]
    %v331 = vstv %s330
    %v332 = vmul.f32 %v331, %v329
    %v333 = vadd.f32 %v322, %v332
    %s334 = sld [smem:[#allocation3 + $0x19]]
    %v335 = vstv %s334
    %v336 = vmul.f32 %v335, %v58
    %s337 = sld [smem:[#allocation6 + $0x19]]
    %v338 = vstv %s337
    %v339 = vadd.f32 %v336, %v338
    %v340 = vtanh.pop %v339
    %s341 = sld [smem:[#allocation8 + $0x19]]
    %v342 = vstv %s341
    %v343 = vmul.f32 %v342, %v340
    %v344 = vadd.f32 %v333, %v343
    %s345 = sld [smem:[#allocation3 + $0x1a]]
    %v346 = vstv %s345
    %v347 = vmul.f32 %v346, %v58
    %s348 = sld [smem:[#allocation6 + $0x1a]]
    %v349 = vstv %s348
    %v350 = vadd.f32 %v347, %v349
    %v351 = vtanh.pop %v350
    %s352 = sld [smem:[#allocation8 + $0x1a]]
    %v353 = vstv %s352
    %v354 = vmul.f32 %v353, %v351
    %v355 = vadd.f32 %v344, %v354
    %s356 = sld [smem:[#allocation3 + $0x1b]]
    %v357 = vstv %s356
    %v358 = vmul.f32 %v357, %v58
    %s359 = sld [smem:[#allocation6 + $0x1b]]
    %v360 = vstv %s359
    %v361 = vadd.f32 %v358, %v360
    %v362 = vtanh.pop %v361
    %s363 = sld [smem:[#allocation8 + $0x1b]]
    %v364 = vstv %s363
    %v365 = vmul.f32 %v364, %v362
    %v366 = vadd.f32 %v355, %v365
    %s367 = sld [smem:[#allocation3 + $0x1c]]
    %v368 = vstv %s367
    %v369 = vmul.f32 %v368, %v58
    %s370 = sld [smem:[#allocation6 + $0x1c]]
    %v371 = vstv %s370
    %v372 = vadd.f32 %v369, %v371
    %v373 = vtanh.pop %v372
    %s374 = sld [smem:[#allocation8 + $0x1c]]
    %v375 = vstv %s374
    %v376 = vmul.f32 %v375, %v373
    %v377 = vadd.f32 %v366, %v376
    %s378 = sld [smem:[#allocation3 + $0x1d]]
    %v379 = vstv %s378
    %v380 = vmul.f32 %v379, %v58
    %s381 = sld [smem:[#allocation6 + $0x1d]]
    %v382 = vstv %s381
    %v383 = vadd.f32 %v380, %v382
    %v384 = vtanh.pop %v383
    %s385 = sld [smem:[#allocation8 + $0x1d]]
    %v386 = vstv %s385
    %v387 = vmul.f32 %v386, %v384
    %v388 = vadd.f32 %v377, %v387
    %s389 = sld [smem:[#allocation3 + $0x1e]]
    %v390 = vstv %s389
    %v391 = vmul.f32 %v390, %v58
    %s392 = sld [smem:[#allocation6 + $0x1e]]
    %v393 = vstv %s392
    %v394 = vadd.f32 %v391, %v393
    %v395 = vtanh.pop %v394
    %s396 = sld [smem:[#allocation8 + $0x1e]]
    %v397 = vstv %s396
    %v398 = vmul.f32 %v397, %v395
    %v399 = vadd.f32 %v388, %v398
    %s400 = sld [smem:[#allocation3 + $0x1f]]
    %v401 = vstv %s400
    %v402 = vmul.f32 %v401, %v58
    %s403 = sld [smem:[#allocation6 + $0x1f]]
    %v404 = vstv %s403
    %v405 = vadd.f32 %v402, %v404
    %v406 = vtanh.pop %v405
    %s407 = sld [smem:[#allocation8 + $0x1f]]
    %v408 = vstv %s407
    %v409 = vmul.f32 %v408, %v406
    %v410 = vadd.f32 %v399, %v409
    %s411 = sld [smem:[#allocation2]]
    %v412 = vstv %s411
    %v413 = vadd.f32 %v410, %v412
    %414 = vst [vmem:[#allocation9] sm:$0x1] %v413
    // Predicated region
    $region34: #{tpu_custom_call.1} parent=1 // pred_check
      _
    $region35: #{tpu_custom_call.1} parent=1 // pred_check_branch
      %416 = sbr.rel (0) target = $region37
    $region36: #{tpu_custom_call.1} parent=1 // pred_region
      %418 = vsyncadd [#allocation4], 0
      %s420 = sshll.u32 [#allocation9], 4
      %s421 = int_to_ptr.vmem [resolvable:$true] %s420
      %s422 = sshll.u32 %s5, 4
      %s423 = int_to_ptr.hbm [resolvable:$true] %s422
      %425 = dma.vmem_to_hbm [thread:$0]  %s421, 16, %s423, [#allocation4]
    $region37: #{tpu_custom_call.1} parent=1 // pred_fallthru
      _
    // Predicated region
    $region38: #{tpu_custom_call.1} parent=1 // pred_check
      _
    $region39: #{tpu_custom_call.1} parent=1 // pred_check_branch
      %427 = sbr.rel (0) target = $region41
    $region40: #{tpu_custom_call.1} parent=1 // pred_region
      %429 = dma.done [#allocation4], 16
    $region41: #{tpu_custom_call.1} parent=1 // pred_fallthru
      _
    %430 = vsyncpa [#allocation4], 1
    %431 = vsyncpa [#allocation5], 1
    %432 = vsyncpa [#allocation7], 1

</llo_original>
